<compile_context>
chip_gen: v7x
topology: tpu7x:2x2x1
jax: 0.10.0
libtpu: 0.0.40
codegen_flags: <defaults>
</compile_context>

<pallas_src>
import functools
import inspect

import jax
import jax.numpy as jnp
from jax.experimental import pallas as pl
from jax.experimental.pallas import tpu as pltpu

_LANE = 128
_SUBLANE_BF16 = 16

# Single-buffering for constant-index operands (weights), if this JAX version
# exposes BlockSpec(pipeline_mode=...).
_HAS_SINGLE_BUFFER = (
    hasattr(pl, "Buffered")
    and "pipeline_mode" in inspect.signature(pl.BlockSpec).parameters
)


def _round_up(x, m):
    return ((x + m - 1) // m) * m


def _choose_tile_m(n):
    """Row-tile: multiple of 16 (bf16 sublanes), large for big N."""
    if n <= 128:
        return _round_up(max(n, _SUBLANE_BF16), _SUBLANE_BF16)
    if n <= 1024:
        return 128
    if n <= 4096:
        return 256
    return 512


def _num_padded_rows(n, tile_m):
    """Pad rows so that the grid step count is 1 or an even number.

    An even number of "parallel" steps splits evenly across v7x's two
    TensorCores (no effect on single-TC v5e/v6e)."""
    if n <= tile_m:
        return tile_m
    return _round_up(n, 2 * tile_m)


def _vmem_budget_bytes():
    """~75% of physical VMEM (v7x: 64 MiB, v5e/v6e: 128 MiB)."""
    try:
        cap = pltpu.get_tpu_info().vmem_capacity_bytes
    except Exception:
        cap = 64 * 1024 * 1024  # conservative (v7x)
    return int(cap * 3 // 4)


def _vmem_estimate_bytes(tile_m, in_pad, hid_pad, n_layers, w_bytes,
                         out_itemsize, single_buffer_weights):
    wf = 1 if single_buffer_weights else 2
    weights = wf * w_bytes                          # resident bf16 weights
    biases = wf * n_layers * hid_pad * 4            # stacked f32 biases
    x_in = 2 * tile_m * in_pad * 2                  # double-buffered bf16 input
    out = 2 * tile_m * hid_pad * out_itemsize       # double-buffered output
    act = 2 * tile_m * hid_pad * 4                  # live f32 activations
    return weights + biases + x_in + out + act


def _resident_spec(block_shape):
    """BlockSpec for an operand that is identical for every grid step."""
    nd = len(block_shape)
    if _HAS_SINGLE_BUFFER:
        return pl.BlockSpec(block_shape, lambda i: (0,) * nd,
                            pipeline_mode=pl.Buffered(1))
    return pl.BlockSpec(block_shape, lambda i: (0,) * nd)


def _make_mlp_kernel(n_layers, mxu_dtype):
    """Fused MLP kernel: n_layers x (matmul + bias + ReLU) on one row tile."""

    def kernel(*refs):
        # refs = [x_ref, w_0, ..., w_{L-1}, b_all_ref, out_ref]
        x_ref = refs[0]
        w_refs = refs[1:1 + n_layers]
        b_ref = refs[1 + n_layers]
        o_ref = refs[-1]

        biases = b_ref[...]                                   # (L, hid_pad) f32
        h = x_ref[...]                                        # bf16 tile
        for l in range(n_layers):
            h = jnp.dot(h.astype(mxu_dtype), w_refs[l][...],
                        preferred_element_type=jnp.float32)   # MXU, f32 acc
            h = jnp.maximum(h + biases[l:l + 1, :], 0.0)      # f32 bias+ReLU (VPU)
        o_ref[...] = h.astype(o_ref.dtype)

    return kernel


@functools.partial(
    jax.jit,
    static_argnames=("tile_m", "hid_dim", "mxu_dtype", "vmem_limit_bytes"))
def _bag_prep_forward(x, w_padded, b_stacked, *, tile_m, hid_dim, mxu_dtype,
                      vmem_limit_bytes):
    n, in_dim = x.shape
    n_layers = len(w_padded)
    in_pad = w_padded[0].shape[0]
    hid_pad = b_stacked.shape[1]
    n_pad = _num_padded_rows(n, tile_m)

    # Pad + cast activations only (weights were preprocessed at init time).
    x_p = jnp.pad(x, ((0, n_pad - n), (0, in_pad - in_dim))).astype(mxu_dtype)

    operands = [x_p]
    in_specs = [pl.BlockSpec((tile_m, in_pad), lambda i: (i, 0))]
    for w in w_padded:
        operands.append(w)
        in_specs.append(_resident_spec(w.shape))
    operands.append(b_stacked)
    in_specs.append(_resident_spec(b_stacked.shape))

    out = pl.pallas_call(
        _make_mlp_kernel(n_layers, mxu_dtype),
        out_shape=jax.ShapeDtypeStruct((n_pad, hid_pad), x.dtype),
        grid_spec=pltpu.PrefetchScalarGridSpec(
            num_scalar_prefetch=0,
            grid=(n_pad // tile_m,),
            in_specs=in_specs,
            out_specs=pl.BlockSpec((tile_m, hid_pad), lambda i: (i, 0)),
        ),
        compiler_params=pltpu.CompilerParams(
            dimension_semantics=("parallel",),
            vmem_limit_bytes=vmem_limit_bytes,
        ),
    )(*operands)

    return out[:n, :hid_dim]


class BagModelPrepNNPallas:
    """Pallas TPU implementation of BagModelPrepNN.forward.

    params: list of (W, b) with W: (fan_in, fan_out), b: (fan_out,) -- the
    transposed layout of nn.Linear, so each layer is ReLU(x @ W + b).

    Weights are padded / bf16-cast once at construction; forward calls only
    touch the activations.  Multiple bags can be processed in one call by
    concatenating their instances along the row axis.
    """

    def __init__(self, params, *, mxu_dtype=jnp.bfloat16):
        assert len(params) >= 1
        in_dim = params[0][0].shape[0]
        hid_dim = params[-1][0].shape[1]
        # The module only produces widths in_dim->hid_dim, then hid_dim->hid_dim.
        fan_in = in_dim
        for (w, b) in params:
            assert w.shape == (fan_in, hid_dim), (
                "BagModelPrepNN expects uniform hidden width; got %r" % (w.shape,))
            assert b.shape == (hid_dim,)
            fan_in = hid_dim

        self.in_dim = in_dim
        self.hid_dim = hid_dim
        self.n_layers = len(params)
        self.mxu_dtype = mxu_dtype
        self.in_pad = _round_up(in_dim, _LANE)
        self.hid_pad = _round_up(hid_dim, _LANE)

        # One-time pad + cast of all weights (exact: zero padding contributes 0).
        w_padded = []
        fan_in_pad = self.in_pad
        for (w, _) in params:
            fi, fo = w.shape
            wp = jnp.pad(jnp.asarray(w, jnp.float32),
                         ((0, fan_in_pad - fi), (0, self.hid_pad - fo)))
            w_padded.append(jax.device_put(wp.astype(mxu_dtype)))
            fan_in_pad = self.hid_pad
        b_stacked = jnp.stack([
            jnp.pad(jnp.asarray(b, jnp.float32), (0, self.hid_pad - b.shape[0]))
            for (_, b) in params])
        self.w_padded = tuple(w_padded)
        self.b_stacked = jax.device_put(b_stacked)
        self._w_bytes = sum(int(w.size) * w.dtype.itemsize for w in self.w_padded)

    def __call__(self, x):
        n, in_dim = x.shape
        assert in_dim == self.in_dim
        out_itemsize = jnp.dtype(x.dtype).itemsize

        budget = _vmem_budget_bytes()
        tile_m = _choose_tile_m(n)
        while tile_m > _SUBLANE_BF16 and _vmem_estimate_bytes(
                tile_m, self.in_pad, self.hid_pad, self.n_layers,
                self._w_bytes, out_itemsize, _HAS_SINGLE_BUFFER) > budget:
            tile_m = max(_SUBLANE_BF16, tile_m // 2)
        est = _vmem_estimate_bytes(tile_m, self.in_pad, self.hid_pad,
                                   self.n_layers, self._w_bytes, out_itemsize,
                                   _HAS_SINGLE_BUFFER)
        vmem_limit = int(min(budget, max(32 * 1024 * 1024, 2 * est)))

        return _bag_prep_forward(
            x, self.w_padded, self.b_stacked,
            tile_m=tile_m, hid_dim=self.hid_dim,
            mxu_dtype=self.mxu_dtype, vmem_limit_bytes=vmem_limit)


def init_params(key, in_dim, hid_dim, prep_n_layers):
    """PyTorch-style U(-1/sqrt(fan_in), 1/sqrt(fan_in)) init, W as (fan_in, fan_out)."""
    dims = [in_dim] + [hid_dim] * prep_n_layers
    params = []
    for l in range(prep_n_layers):
        fan_in, fan_out = dims[l], dims[l + 1]
        key, kw, kb = jax.random.split(key, 3)
        bound = 1.0 / jnp.sqrt(fan_in)
        w = jax.random.uniform(kw, (fan_in, fan_out), jnp.float32, -bound, bound)
        b = jax.random.uniform(kb, (fan_out,), jnp.float32, -bound, bound)
        params.append((w, b))
    return params


def reference_mlp_f32(x, params):
    h = x
    for (w, b) in params:
        h = jnp.maximum(h @ w + b, 0.0)
    return h


def reference_mlp_bf16(x, params):
    """Same numerics as the kernel: bf16 MXU inputs, f32 accumulation."""
    h = x
    for (w, b) in params:
        h = jnp.dot(h.astype(jnp.bfloat16), w.astype(jnp.bfloat16),
                    preferred_element_type=jnp.float32) + b
        h = jnp.maximum(h, 0.0)
    return h


if __name__ == "__main__":
    # Small shapes consistent with the module: N instances in a bag,
    # in_dim features, hid_dim hidden units, 3 prep layers.
    N, IN_DIM, HID_DIM, PREP_N_LAYERS = 16, 16, 32, 3

    key = jax.random.PRNGKey(0)
    key, kx = jax.random.split(key)
    x = jax.random.normal(kx, (N, IN_DIM), dtype=jnp.float32)
    params = init_params(key, IN_DIM, HID_DIM, PREP_N_LAYERS)

    model = BagModelPrepNNPallas(params)

    out = jax.block_until_ready(model(x))
    assert out.shape == (N, HID_DIM)
    assert out.dtype == x.dtype
    assert jnp.allclose(out, reference_mlp_bf16(x, params), atol=2e-3, rtol=2e-3)
    assert jnp.allclose(out, reference_mlp_f32(x, params), atol=3e-2, rtol=3e-2)

    # Second case: non-aligned N > 128 exercises row padding and an even,
    # multi-step "parallel" grid (300 -> 512 rows, 4 steps of 128).
    N2 = 300
    key, kx2 = jax.random.split(key)
    x2 = jax.random.normal(kx2, (N2, IN_DIM), dtype=jnp.float32)
    out2 = jax.block_until_ready(model(x2))
    assert out2.shape == (N2, HID_DIM)
    assert jnp.allclose(out2, reference_mlp_bf16(x2, params), atol=2e-3, rtol=2e-3)
    assert jnp.allclose(out2, reference_mlp_f32(x2, params), atol=3e-2, rtol=3e-2)

    print("KERNEL_OK")
</pallas_src>

<mosaic_0001>
module attributes {stable_mosaic.version = 11 : i64} {
  func.func @kernel(%arg0: i32, %arg1: memref<16x128xbf16, #tpu.memory_space<vmem>>, %arg2: memref<128x128xbf16, #tpu.memory_space<vmem>>, %arg3: memref<128x128xbf16, #tpu.memory_space<vmem>>, %arg4: memref<128x128xbf16, #tpu.memory_space<vmem>>, %arg5: memref<3x128xf32, #tpu.memory_space<vmem>>, %arg6: memref<16x128xf32, #tpu.memory_space<vmem>>) attributes {dimension_semantics = [#tpu.dimension_semantics<parallel>], iteration_bounds = array<i64: 1>, scalar_prefetch = 0 : i64, scratch_operands = 0 : i64, tpu.core_type = #tpu.core_type<tc>, window_params = [{transform_indices = @transform_0, window_bounds = array<i64: 16, 128>}, {pipeline_mode = #tpu.pipeline_mode<synchronous>, transform_indices = @transform_1, window_bounds = array<i64: 128, 128>}, {pipeline_mode = #tpu.pipeline_mode<synchronous>, transform_indices = @transform_2, window_bounds = array<i64: 128, 128>}, {pipeline_mode = #tpu.pipeline_mode<synchronous>, transform_indices = @transform_3, window_bounds = array<i64: 128, 128>}, {pipeline_mode = #tpu.pipeline_mode<synchronous>, transform_indices = @transform_4, window_bounds = array<i64: 3, 128>}, {transform_indices = @transform_5, window_bounds = array<i64: 16, 128>}]} {
    %c0 = arith.constant 0 : index
    %c0_0 = arith.constant 0 : index
    %0 = vector.load %arg5[%c0, %c0_0] : memref<3x128xf32, #tpu.memory_space<vmem>>, vector<3x128xf32>
    %c0_1 = arith.constant 0 : index
    %c0_2 = arith.constant 0 : index
    %1 = vector.load %arg1[%c0_1, %c0_2] : memref<16x128xbf16, #tpu.memory_space<vmem>>, vector<16x128xbf16>
    %c0_3 = arith.constant 0 : index
    %c0_4 = arith.constant 0 : index
    %2 = vector.load %arg2[%c0_3, %c0_4] : memref<128x128xbf16, #tpu.memory_space<vmem>>, vector<128x128xbf16>
    %cst = arith.constant dense<0.000000e+00> : vector<16x128xf32>
    %3 = tpu.matmul %1, %2, %cst {dimension_numbers = #tpu.dot_dimension_numbers<[1], [0], [0], [1], [0, 0, 1, 1], [], []>} : vector<16x128xbf16>, vector<128x128xbf16>, vector<16x128xf32> -> vector<16x128xf32>
    %4 = vector.extract_strided_slice %0 {offsets = [0, 0], sizes = [1, 128], strides = [1, 1]} : vector<3x128xf32> to vector<1x128xf32>
    %5 = vector.broadcast %4 : vector<1x128xf32> to vector<16x128xf32>
    %6 = arith.addf %3, %5 : vector<16x128xf32>
    %cst_5 = arith.constant 0.000000e+00 : f32
    %7 = vector.broadcast %cst_5 : f32 to vector<16x128xf32>
    %8 = arith.maximumf %6, %7 : vector<16x128xf32>
    %9 = arith.truncf %8 : vector<16x128xf32> to vector<16x128xbf16>
    %c0_6 = arith.constant 0 : index
    %c0_7 = arith.constant 0 : index
    %10 = vector.load %arg3[%c0_6, %c0_7] : memref<128x128xbf16, #tpu.memory_space<vmem>>, vector<128x128xbf16>
    %cst_8 = arith.constant dense<0.000000e+00> : vector<16x128xf32>
    %11 = tpu.matmul %9, %10, %cst_8 {dimension_numbers = #tpu.dot_dimension_numbers<[1], [0], [0], [1], [0, 0, 1, 1], [], []>} : vector<16x128xbf16>, vector<128x128xbf16>, vector<16x128xf32> -> vector<16x128xf32>
    %12 = vector.extract_strided_slice %0 {offsets = [1, 0], sizes = [1, 128], strides = [1, 1]} : vector<3x128xf32> to vector<1x128xf32>
    %13 = vector.broadcast %12 : vector<1x128xf32> to vector<16x128xf32>
    %14 = arith.addf %11, %13 : vector<16x128xf32>
    %cst_9 = arith.constant 0.000000e+00 : f32
    %15 = vector.broadcast %cst_9 : f32 to vector<16x128xf32>
    %16 = arith.maximumf %14, %15 : vector<16x128xf32>
    %17 = arith.truncf %16 : vector<16x128xf32> to vector<16x128xbf16>
    %c0_10 = arith.constant 0 : index
    %c0_11 = arith.constant 0 : index
    %18 = vector.load %arg4[%c0_10, %c0_11] : memref<128x128xbf16, #tpu.memory_space<vmem>>, vector<128x128xbf16>
    %cst_12 = arith.constant dense<0.000000e+00> : vector<16x128xf32>
    %19 = tpu.matmul %17, %18, %cst_12 {dimension_numbers = #tpu.dot_dimension_numbers<[1], [0], [0], [1], [0, 0, 1, 1], [], []>} : vector<16x128xbf16>, vector<128x128xbf16>, vector<16x128xf32> -> vector<16x128xf32>
    %20 = vector.extract_strided_slice %0 {offsets = [2, 0], sizes = [1, 128], strides = [1, 1]} : vector<3x128xf32> to vector<1x128xf32>
    %21 = vector.broadcast %20 : vector<1x128xf32> to vector<16x128xf32>
    %22 = arith.addf %19, %21 : vector<16x128xf32>
    %cst_13 = arith.constant 0.000000e+00 : f32
    %23 = vector.broadcast %cst_13 : f32 to vector<16x128xf32>
    %24 = arith.maximumf %22, %23 : vector<16x128xf32>
    %c0_14 = arith.constant 0 : index
    %c0_15 = arith.constant 0 : index
    %25 = vector.load %arg6[%c0_14, %c0_15] : memref<16x128xf32, #tpu.memory_space<vmem>>, vector<16x128xf32>
    tpu.vector_store %arg6[%c0_14, %c0_15], %24 {strides = array<i32>} : memref<16x128xf32, #tpu.memory_space<vmem>>, vector<16x128xf32>,
    return
  }
  func.func @transform_0(%arg0: i32) -> (i32, i32) {
    %c0_i32 = arith.constant 0 : i32
    %c0_i32_0 = arith.constant 0 : i32
    return %arg0, %c0_i32 : i32, i32
  }
  func.func @transform_1(%arg0: i32) -> (i32, i32) {
    %c0_i32 = arith.constant 0 : i32
    %c0_i32_0 = arith.constant 0 : i32
    %c0_i32_1 = arith.constant 0 : i32
    return %c0_i32, %c0_i32_0 : i32, i32
  }
  func.func @transform_2(%arg0: i32) -> (i32, i32) {
    %c0_i32 = arith.constant 0 : i32
    %c0_i32_0 = arith.constant 0 : i32
    %c0_i32_1 = arith.constant 0 : i32
    return %c0_i32, %c0_i32_0 : i32, i32
  }
  func.func @transform_3(%arg0: i32) -> (i32, i32) {
    %c0_i32 = arith.constant 0 : i32
    %c0_i32_0 = arith.constant 0 : i32
    %c0_i32_1 = arith.constant 0 : i32
    return %c0_i32, %c0_i32_0 : i32, i32
  }
  func.func @transform_4(%arg0: i32) -> (i32, i32) {
    %c0_i32 = arith.constant 0 : i32
    %c0_i32_0 = arith.constant 0 : i32
    %c0_i32_1 = arith.constant 0 : i32
    return %c0_i32, %c0_i32_0 : i32, i32
  }
  func.func @transform_5(%arg0: i32) -> (i32, i32) {
    %c0_i32 = arith.constant 0 : i32
    %c0_i32_0 = arith.constant 0 : i32
    return %arg0, %c0_i32 : i32, i32
  }
}

</mosaic_0001>

<llo_original>
// kernel: _bag_prep_forward.1
$region0: #{_bag_prep_forward.1}
  #allocation0 [shape = 'u32[]', space=smem, size = 0x4, offset = 0x4, fixed_abs, tag = 'smem constant byte address 0x4 - core index']
  #allocation1 [shape = 'u32[144,128]{1,0:T(1,128)}', space=vmem, size = 0x12000, scoped, tag = 'internal scratch']
  %s0 = inlined_call_operand.vmem [shape: bf16[16,128], index: 0, kind: input, shape index: {}]
  %s1 = inlined_call_operand.hbm [shape: bf16[128,128], index: 1, kind: input, shape index: {}]
  %s2 = inlined_call_operand.hbm [shape: bf16[128,128], index: 2, kind: input, shape index: {}]
  %s3 = inlined_call_operand.hbm [shape: bf16[128,128], index: 3, kind: input, shape index: {}]
  %s4 = inlined_call_operand.vmem [shape: f32[3,128], index: 4, kind: input, shape index: {}]
  %s5 = inlined_call_operand.hbm [shape: f32[16,128], index: 5, kind: output, shape index: {}]
  %s6 = sld [smem:[#allocation0]]
  $region42: #{_bag_prep_forward.1} parent=0
    _
  %s8 = ssub.s32 1, %s6
  %s9 = scalar_select 0, %s8, %s6
  $region1: #{_bag_prep_forward.1} parent=0
    #allocation2 [shape = 'u8[32768]{0}', space=vmem, size = 0x8000, scoped, tag = 'input window, operand 1, single buffered']
    #allocation3 [shape = 's32[1]{0}', space=sflag, size = 0x4, scoped, tag = 'scoped memory for _bag_prep_forward.1']
    #allocation4 [shape = 's32[1]{0}', space=sflag, size = 0x4, scoped, tag = 'scoped memory for _bag_prep_forward.1']
    #allocation5 [shape = 'u8[32768]{0}', space=vmem, size = 0x8000, scoped, tag = 'input window, operand 2, single buffered']
    #allocation6 [shape = 's32[1]{0}', space=sflag, size = 0x4, scoped, tag = 'scoped memory for _bag_prep_forward.1']
    #allocation7 [shape = 'u8[32768]{0}', space=vmem, size = 0x8000, scoped, tag = 'input window, operand 3, single buffered']
    #allocation8 [shape = 'u8[8192]{0}', space=vmem, size = 0x2000, scoped, tag = 'output window, operand 0, single buffered']
    %10 = vsyncpa [#allocation3], 0
    %11 = vsyncpa [#allocation6], 0
    %12 = vsyncpa [#allocation4], 0
    // Predicated region
    $region2: #{_bag_prep_forward.1} parent=1 // pred_check
      _
    $region3: #{_bag_prep_forward.1} parent=1 // pred_check_branch
      %14 = sbr.rel (0) target = $region5
    $region4: #{_bag_prep_forward.1} parent=1 // pred_region
      _
    $region5: #{_bag_prep_forward.1} parent=1 // pred_fallthru
      _
    // Predicated region
    $region6: #{_bag_prep_forward.1} parent=1 // pred_check
      _
    $region7: #{_bag_prep_forward.1} parent=1 // pred_check_branch
      %16 = sbr.rel (0) target = $region9
    $region8: #{_bag_prep_forward.1} parent=1 // pred_region
      %s18 = ssub.s32 1024, 1024
      %19 = vsyncadd [#allocation3], %s18
      %s20 = sshll.u32 [#allocation2], 4
      %s21 = int_to_ptr.vmem [resolvable:$true] %s20
      %26 = dma.hbm_to_vmem [thread:$0]  %s1, 1024, %s21, [#allocation3], 64, 64, 4
    $region9: #{_bag_prep_forward.1} parent=1 // pred_fallthru
      _
    // Predicated region
    $region10: #{_bag_prep_forward.1} parent=1 // pred_check
      _
    $region11: #{_bag_prep_forward.1} parent=1 // pred_check_branch
      %28 = sbr.rel (0) target = $region13
    $region12: #{_bag_prep_forward.1} parent=1 // pred_region
      %s30 = ssub.s32 1024, 1024
      %31 = vsyncadd [#allocation6], %s30
      %s32 = sshll.u32 [#allocation5], 4
      %s33 = int_to_ptr.vmem [resolvable:$true] %s32
      %38 = dma.hbm_to_vmem [thread:$0]  %s2, 1024, %s33, [#allocation6], 64, 64, 4
    $region13: #{_bag_prep_forward.1} parent=1 // pred_fallthru
      _
    // Predicated region
    $region14: #{_bag_prep_forward.1} parent=1 // pred_check
      _
    $region15: #{_bag_prep_forward.1} parent=1 // pred_check_branch
      %40 = sbr.rel (0) target = $region17
    $region16: #{_bag_prep_forward.1} parent=1 // pred_region
      %s42 = ssub.s32 1024, 1024
      %43 = vsyncadd [#allocation6], %s42
      %s44 = sshll.u32 [#allocation7], 4
      %s45 = int_to_ptr.vmem [resolvable:$true] %s44
      %50 = dma.hbm_to_vmem [thread:$0]  %s3, 1024, %s45, [#allocation6], 64, 64, 4
    $region17: #{_bag_prep_forward.1} parent=1 // pred_fallthru
      _
    // Predicated region
    $region18: #{_bag_prep_forward.1} parent=1 // pred_check
      _
    $region19: #{_bag_prep_forward.1} parent=1 // pred_check_branch
      %52 = sbr.rel (0) target = $region21
    $region20: #{_bag_prep_forward.1} parent=1 // pred_region
      _
    $region21: #{_bag_prep_forward.1} parent=1 // pred_fallthru
      _
    // Predicated region
    $region22: #{_bag_prep_forward.1} parent=1 // pred_check
      _
    $region23: #{_bag_prep_forward.1} parent=1 // pred_check_branch
      %54 = sbr.rel (0) target = $region25
    $region24: #{_bag_prep_forward.1} parent=1 // pred_region
      %55 = dma.done [#allocation3], 1024
    $region25: #{_bag_prep_forward.1} parent=1 // pred_fallthru
      _
    // Predicated region
    $region26: #{_bag_prep_forward.1} parent=1 // pred_check
      _
    $region27: #{_bag_prep_forward.1} parent=1 // pred_check_branch
      %57 = sbr.rel (0) target = $region29
    $region28: #{_bag_prep_forward.1} parent=1 // pred_region
      %58 = dma.done [#allocation6], 1024
    $region29: #{_bag_prep_forward.1} parent=1 // pred_fallthru
      _
    // Predicated region
    $region30: #{_bag_prep_forward.1} parent=1 // pred_check
      _
    $region31: #{_bag_prep_forward.1} parent=1 // pred_check_branch
      %60 = sbr.rel (0) target = $region33
    $region32: #{_bag_prep_forward.1} parent=1 // pred_region
      %61 = dma.done [#allocation6], 1024
    $region33: #{_bag_prep_forward.1} parent=1 // pred_fallthru
      _
    %v63 = vld [vmem:[%s4] sm:$0x7]
    %v64 = vld [vmem:[%s0] sm:$0xf]
    %v65 = vld [vmem:[%s0 + $0x4] sm:$0xf]
    %v66 = vld [vmem:[#allocation2] sm:$0xf]
    %v67 = vld [vmem:[#allocation2 + $0x4] sm:$0xf]
    %v68 = vld [vmem:[#allocation2 + $0x8] sm:$0xf]
    %v69 = vld [vmem:[#allocation2 + $0xc] sm:$0xf]
    %v70 = vld [vmem:[#allocation2 + $0x10] sm:$0xf]
    %v71 = vld [vmem:[#allocation2 + $0x14] sm:$0xf]
    %v72 = vld [vmem:[#allocation2 + $0x18] sm:$0xf]
    %v73 = vld [vmem:[#allocation2 + $0x1c] sm:$0xf]
    %v74 = vld [vmem:[#allocation2 + $0x20] sm:$0xf]
    %v75 = vld [vmem:[#allocation2 + $0x24] sm:$0xf]
    %v76 = vld [vmem:[#allocation2 + $0x28] sm:$0xf]
    %v77 = vld [vmem:[#allocation2 + $0x2c] sm:$0xf]
    %v78 = vld [vmem:[#allocation2 + $0x30] sm:$0xf]
    %v79 = vld [vmem:[#allocation2 + $0x34] sm:$0xf]
    %v80 = vld [vmem:[#allocation2 + $0x38] sm:$0xf]
    %v81 = vld [vmem:[#allocation2 + $0x3c] sm:$0xf]
    %v82 = vlaneseq
    %v83 = vshrl.u32 %v82, 7
    %v84 = vsub.s32 0, %v83
    %v85 = vrot.slane %v63, %v84
    %v88 = vunpack.c.l.b16 %v64
    %v89 = vunpack.c.l.b16 %v65
    %v90 = vpack.c.b16 %v89, %v88
    %v108 = vunpack.c.l.b16 %v66
    %v109 = vunpack.c.l.b16 %v67
    %v110 = vunpack.c.l.b16 %v68
    %v111 = vunpack.c.l.b16 %v69
    %v112 = vunpack.c.l.b16 %v70
    %v113 = vunpack.c.l.b16 %v71
    %v114 = vunpack.c.l.b16 %v72
    %v115 = vunpack.c.l.b16 %v73
    %v116 = vunpack.c.l.b16 %v74
    %v117 = vunpack.c.l.b16 %v75
    %v118 = vunpack.c.l.b16 %v76
    %v119 = vunpack.c.l.b16 %v77
    %v120 = vunpack.c.l.b16 %v78
    %v121 = vunpack.c.l.b16 %v79
    %v122 = vunpack.c.l.b16 %v80
    %v123 = vunpack.c.l.b16 %v81
    %v124 = vpack.c.b16 %v109, %v108
    %v125 = vpack.c.b16 %v111, %v110
    %v126 = vpack.c.b16 %v113, %v112
    %v127 = vpack.c.b16 %v115, %v114
    %v128 = vpack.c.b16 %v117, %v116
    %v129 = vpack.c.b16 %v119, %v118
    %v130 = vpack.c.b16 %v121, %v120
    %v131 = vpack.c.b16 %v123, %v122
    %140 = vmatprep.subr.bf16.mxu0 0
    %141 = vmatpush1.bf16.msra.mxu0 %v124
    %142 = vmatprep.subr.bf16.mxu0 0
    %143 = vmatpush1.bf16.msra.mxu0 %v125
    %144 = vmatprep.subr.bf16.mxu0 0
    %145 = vmatpush1.bf16.msra.mxu0 %v126
    %146 = vmatprep.subr.bf16.mxu0 0
    %147 = vmatpush1.bf16.msra.mxu0 %v127
    %148 = vmatprep.subr.bf16.mxu0 0
    %149 = vmatpush1.bf16.msra.mxu0 %v128
    %150 = vmatprep.subr.bf16.mxu0 0
    %151 = vmatpush1.bf16.msra.mxu0 %v129
    %152 = vmatprep.subr.bf16.mxu0 0
    %153 = vmatpush1.bf16.msra.mxu0 %v130
    %154 = vmatprep.subr.bf16.mxu0 0
    %155 = vmatpush1.bf16.msra.mxu0 %v131
    %156 = vmatprep.subr.bf16.mxu0 0
    %157 = vmatpush1.bf16.msra.mxu0 0
    %158 = vmatprep.subr.bf16.mxu0 0
    %159 = vmatpush1.bf16.msra.mxu0 0
    %160 = vmatprep.subr.bf16.mxu0 0
    %161 = vmatpush1.bf16.msra.mxu0 0
    %162 = vmatprep.subr.bf16.mxu0 0
    %163 = vmatpush1.bf16.msra.mxu0 0
    %164 = vmatprep.subr.bf16.mxu0 0
    %165 = vmatpush1.bf16.msra.mxu0 0
    %166 = vmatprep.subr.bf16.mxu0 0
    %167 = vmatpush1.bf16.msra.mxu0 0
    %168 = vmatprep.subr.bf16.mxu0 0
    %169 = vmatpush1.bf16.msra.mxu0 0
    %170 = vmatprep.subr.bf16.mxu0 0
    %171 = vmatpush1.bf16.msra.mxu0 0
    %172 = vmatprep.mubr.bf16.mxu0 0
    %173 = vmatmul.mubr.bf16.gmra.mrb[0].mxu0 %v90
    %v174 = vpop.f32.mrb[0].mxu0
    %v175 = vadd.f32 %v85, %v174
    %v176 = vpop.f32.mrb[0].mxu0
    %v177 = vpop.f32.mrb[0].mxu0
    %v178 = vadd.f32 %v85, %v177
    %v179 = vpop.f32.mrb[0].mxu0
    %180 = vdwg.mxu0
    %v181 = vmax.f32 %v175, 0.0
    %v182 = vmax.f32 %v178, 0.0
    %v183 = vpack.c.bf16 %v182, %v181
    %v184 = vld [vmem:[#allocation5] sm:$0xf]
    %v185 = vld [vmem:[#allocation5 + $0x4] sm:$0xf]
    %v186 = vld [vmem:[#allocation5 + $0x8] sm:$0xf]
    %v187 = vld [vmem:[#allocation5 + $0xc] sm:$0xf]
    %v188 = vld [vmem:[#allocation5 + $0x10] sm:$0xf]
    %v189 = vld [vmem:[#allocation5 + $0x14] sm:$0xf]
    %v190 = vld [vmem:[#allocation5 + $0x18] sm:$0xf]
    %v191 = vld [vmem:[#allocation5 + $0x1c] sm:$0xf]
    %v192 = vld [vmem:[#allocation5 + $0x20] sm:$0xf]
    %v193 = vld [vmem:[#allocation5 + $0x24] sm:$0xf]
    %v194 = vld [vmem:[#allocation5 + $0x28] sm:$0xf]
    %v195 = vld [vmem:[#allocation5 + $0x2c] sm:$0xf]
    %v196 = vld [vmem:[#allocation5 + $0x30] sm:$0xf]
    %v197 = vld [vmem:[#allocation5 + $0x34] sm:$0xf]
    %v198 = vld [vmem:[#allocation5 + $0x38] sm:$0xf]
    %v199 = vld [vmem:[#allocation5 + $0x3c] sm:$0xf]
    %v200 = vlaneseq
    %v201 = vshrl.u32 %v200, 7
    %v202 = vsub.s32 1, %v201
    %v203 = vrot.slane %v63, %v202
    %v220 = vunpack.c.l.b16 %v184
    %v221 = vunpack.c.l.b16 %v185
    %v222 = vunpack.c.l.b16 %v186
    %v223 = vunpack.c.l.b16 %v187
    %v224 = vunpack.c.l.b16 %v188
    %v225 = vunpack.c.l.b16 %v189
    %v226 = vunpack.c.l.b16 %v190
    %v227 = vunpack.c.l.b16 %v191
    %v228 = vunpack.c.l.b16 %v192
    %v229 = vunpack.c.l.b16 %v193
    %v230 = vunpack.c.l.b16 %v194
    %v231 = vunpack.c.l.b16 %v195
    %v232 = vunpack.c.l.b16 %v196
    %v233 = vunpack.c.l.b16 %v197
    %v234 = vunpack.c.l.b16 %v198
    %v235 = vunpack.c.l.b16 %v199
    %v236 = vpack.c.b16 %v221, %v220
    %v237 = vpack.c.b16 %v223, %v222
    %v238 = vpack.c.b16 %v225, %v224
    %v239 = vpack.c.b16 %v227, %v226
    %v240 = vpack.c.b16 %v229, %v228
    %v241 = vpack.c.b16 %v231, %v230
    %v242 = vpack.c.b16 %v233, %v232
    %v243 = vpack.c.b16 %v235, %v234
    %252 = vmatprep.subr.bf16.mxu0 0
    %253 = vmatpush1.bf16.msra.mxu0 %v236
    %254 = vmatprep.subr.bf16.mxu0 0
    %255 = vmatpush1.bf16.msra.mxu0 %v237
    %256 = vmatprep.subr.bf16.mxu0 0
    %257 = vmatpush1.bf16.msra.mxu0 %v238
    %258 = vmatprep.subr.bf16.mxu0 0
    %259 = vmatpush1.bf16.msra.mxu0 %v239
    %260 = vmatprep.subr.bf16.mxu0 0
    %261 = vmatpush1.bf16.msra.mxu0 %v240
    %262 = vmatprep.subr.bf16.mxu0 0
    %263 = vmatpush1.bf16.msra.mxu0 %v241
    %264 = vmatprep.subr.bf16.mxu0 0
    %265 = vmatpush1.bf16.msra.mxu0 %v242
    %266 = vmatprep.subr.bf16.mxu0 0
    %267 = vmatpush1.bf16.msra.mxu0 %v243
    %268 = vmatprep.subr.bf16.mxu0 0
    %269 = vmatpush1.bf16.msra.mxu0 0
    %270 = vmatprep.subr.bf16.mxu0 0
    %271 = vmatpush1.bf16.msra.mxu0 0
    %272 = vmatprep.subr.bf16.mxu0 0
    %273 = vmatpush1.bf16.msra.mxu0 0
    %274 = vmatprep.subr.bf16.mxu0 0
    %275 = vmatpush1.bf16.msra.mxu0 0
    %276 = vmatprep.subr.bf16.mxu0 0
    %277 = vmatpush1.bf16.msra.mxu0 0
    %278 = vmatprep.subr.bf16.mxu0 0
    %279 = vmatpush1.bf16.msra.mxu0 0
    %280 = vmatprep.subr.bf16.mxu0 0
    %281 = vmatpush1.bf16.msra.mxu0 0
    %282 = vmatprep.subr.bf16.mxu0 0
    %283 = vmatpush1.bf16.msra.mxu0 0
    %284 = vmatprep.mubr.bf16.mxu0 0
    %285 = vmatmul.mubr.bf16.gmra.mrb[0].mxu0 %v183
    %v286 = vpop.f32.mrb[0].mxu0
    %v287 = vadd.f32 %v203, %v286
    %v288 = vpop.f32.mrb[0].mxu0
    %v289 = vpop.f32.mrb[0].mxu0
    %v290 = vadd.f32 %v203, %v289
    %v291 = vpop.f32.mrb[0].mxu0
    %292 = vdwg.mxu0
    %v293 = vmax.f32 %v287, 0.0
    %v294 = vmax.f32 %v290, 0.0
    %v295 = vpack.c.bf16 %v294, %v293
    %v296 = vld [vmem:[#allocation7] sm:$0xf]
    %v297 = vld [vmem:[#allocation7 + $0x4] sm:$0xf]
    %v298 = vld [vmem:[#allocation7 + $0x8] sm:$0xf]
    %v299 = vld [vmem:[#allocation7 + $0xc] sm:$0xf]
    %v300 = vld [vmem:[#allocation7 + $0x10] sm:$0xf]
    %v301 = vld [vmem:[#allocation7 + $0x14] sm:$0xf]
    %v302 = vld [vmem:[#allocation7 + $0x18] sm:$0xf]
    %v303 = vld [vmem:[#allocation7 + $0x1c] sm:$0xf]
    %v304 = vld [vmem:[#allocation7 + $0x20] sm:$0xf]
    %v305 = vld [vmem:[#allocation7 + $0x24] sm:$0xf]
    %v306 = vld [vmem:[#allocation7 + $0x28] sm:$0xf]
    %v307 = vld [vmem:[#allocation7 + $0x2c] sm:$0xf]
    %v308 = vld [vmem:[#allocation7 + $0x30] sm:$0xf]
    %v309 = vld [vmem:[#allocation7 + $0x34] sm:$0xf]
    %v310 = vld [vmem:[#allocation7 + $0x38] sm:$0xf]
    %v311 = vld [vmem:[#allocation7 + $0x3c] sm:$0xf]
    %v312 = vlaneseq
    %v313 = vshrl.u32 %v312, 7
    %v314 = vsub.s32 2, %v313
    %v315 = vrot.slane %v63, %v314
    %v332 = vunpack.c.l.b16 %v296
    %v333 = vunpack.c.l.b16 %v297
    %v334 = vunpack.c.l.b16 %v298
    %v335 = vunpack.c.l.b16 %v299
    %v336 = vunpack.c.l.b16 %v300
    %v337 = vunpack.c.l.b16 %v301
    %v338 = vunpack.c.l.b16 %v302
    %v339 = vunpack.c.l.b16 %v303
    %v340 = vunpack.c.l.b16 %v304
    %v341 = vunpack.c.l.b16 %v305
    %v342 = vunpack.c.l.b16 %v306
    %v343 = vunpack.c.l.b16 %v307
    %v344 = vunpack.c.l.b16 %v308
    %v345 = vunpack.c.l.b16 %v309
    %v346 = vunpack.c.l.b16 %v310
    %v347 = vunpack.c.l.b16 %v311
    %v348 = vpack.c.b16 %v333, %v332
    %v349 = vpack.c.b16 %v335, %v334
    %v350 = vpack.c.b16 %v337, %v336
    %v351 = vpack.c.b16 %v339, %v338
    %v352 = vpack.c.b16 %v341, %v340
    %v353 = vpack.c.b16 %v343, %v342
    %v354 = vpack.c.b16 %v345, %v344
    %v355 = vpack.c.b16 %v347, %v346
    %364 = vmatprep.subr.bf16.mxu0 0
    %365 = vmatpush1.bf16.msra.mxu0 %v348
    %366 = vmatprep.subr.bf16.mxu0 0
    %367 = vmatpush1.bf16.msra.mxu0 %v349
    %368 = vmatprep.subr.bf16.mxu0 0
    %369 = vmatpush1.bf16.msra.mxu0 %v350
    %370 = vmatprep.subr.bf16.mxu0 0
    %371 = vmatpush1.bf16.msra.mxu0 %v351
    %372 = vmatprep.subr.bf16.mxu0 0
    %373 = vmatpush1.bf16.msra.mxu0 %v352
    %374 = vmatprep.subr.bf16.mxu0 0
    %375 = vmatpush1.bf16.msra.mxu0 %v353
    %376 = vmatprep.subr.bf16.mxu0 0
    %377 = vmatpush1.bf16.msra.mxu0 %v354
    %378 = vmatprep.subr.bf16.mxu0 0
    %379 = vmatpush1.bf16.msra.mxu0 %v355
    %380 = vmatprep.subr.bf16.mxu0 0
    %381 = vmatpush1.bf16.msra.mxu0 0
    %382 = vmatprep.subr.bf16.mxu0 0
    %383 = vmatpush1.bf16.msra.mxu0 0
    %384 = vmatprep.subr.bf16.mxu0 0
    %385 = vmatpush1.bf16.msra.mxu0 0
    %386 = vmatprep.subr.bf16.mxu0 0
    %387 = vmatpush1.bf16.msra.mxu0 0
    %388 = vmatprep.subr.bf16.mxu0 0
    %389 = vmatpush1.bf16.msra.mxu0 0
    %390 = vmatprep.subr.bf16.mxu0 0
    %391 = vmatpush1.bf16.msra.mxu0 0
    %392 = vmatprep.subr.bf16.mxu0 0
    %393 = vmatpush1.bf16.msra.mxu0 0
    %394 = vmatprep.subr.bf16.mxu0 0
    %395 = vmatpush1.bf16.msra.mxu0 0
    %396 = vmatprep.mubr.bf16.mxu0 0
    %397 = vmatmul.mubr.bf16.gmra.mrb[0].mxu0 %v295
    %v398 = vpop.f32.mrb[0].mxu0
    %v399 = vadd.f32 %v315, %v398
    %v400 = vpop.f32.mrb[0].mxu0
    %v401 = vpop.f32.mrb[0].mxu0
    %v402 = vadd.f32 %v315, %v401
    %v403 = vpop.f32.mrb[0].mxu0
    %404 = vdwg.mxu0
    %v405 = vmax.f32 %v399, 0.0
    %v406 = vmax.f32 %v402, 0.0
    %407 = vst [vmem:[#allocation8] sm:$0xff] %v405
    %408 = vst [vmem:[#allocation8 + $0x8] sm:$0xff] %v406
    // Predicated region
    $region34: #{_bag_prep_forward.1} parent=1 // pred_check
      _
    $region35: #{_bag_prep_forward.1} parent=1 // pred_check_branch
      %410 = sbr.rel (0) target = $region37
    $region36: #{_bag_prep_forward.1} parent=1 // pred_region
      %s412 = ssub.s32 256, 256
      %413 = vsyncadd [#allocation4], %s412
      %s414 = sshll.u32 [#allocation8], 4
      %s415 = int_to_ptr.vmem [resolvable:$true] %s414
      %420 = dma.vmem_to_hbm [thread:$0]  %s415, 256, %s5, [#allocation4], 128, 128, 8
    $region37: #{_bag_prep_forward.1} parent=1 // pred_fallthru
      _
    // Predicated region
    $region38: #{_bag_prep_forward.1} parent=1 // pred_check
      _
    $region39: #{_bag_prep_forward.1} parent=1 // pred_check_branch
      %422 = sbr.rel (0) target = $region41
    $region40: #{_bag_prep_forward.1} parent=1 // pred_region
      %423 = dma.done [#allocation4], 256
    $region41: #{_bag_prep_forward.1} parent=1 // pred_fallthru
      _
    %424 = vsyncpa [#allocation3], 1
    %425 = vsyncpa [#allocation6], 1
    %426 = vsyncpa [#allocation4], 1

</llo_original>
